<compile_context>
chip_gen: v5e
topology: v5e:2x2
jax: 0.10.0
libtpu: 0.0.40
codegen_flags: <defaults>
</compile_context>

<pallas_src>
import functools
import math

import jax
import jax.numpy as jnp
from jax.experimental import pallas as pl
from jax.experimental.pallas import tpu as pltpu

_LANE = 128


def _layer_norm_kernel(x_ref, scale_ref, shift_ref, o_ref, *, eps, hidden, masked):
    # x_ref: (tile_rows, hidden_p); scale_ref/shift_ref: (1, hidden_p) in f32.
    x = x_ref[...].astype(jnp.float32)
    inv_n = 1.0 / float(hidden)

    if masked:
        # Wrapper zero-pads the hidden axis, so padded lanes contribute 0 to the
        # mean sum; only the variance term needs an explicit mask.
        mean = jnp.sum(x, axis=-1, keepdims=True) * inv_n
        centered = x - mean
        lane = jax.lax.broadcasted_iota(jnp.int32, (1, x.shape[-1]), 1)
        cz = jnp.where(lane < hidden, centered, 0.0)
        var = jnp.sum(cz * cz, axis=-1, keepdims=True) * inv_n
    else:
        mean = jnp.sum(x, axis=-1, keepdims=True) * inv_n
        centered = x - mean
        var = jnp.sum(centered * centered, axis=-1, keepdims=True) * inv_n

    inv_std = jax.lax.rsqrt(var + eps)
    # Fused affine: y = centered * (inv_std * scale) + shift  (no `norm` temp).
    y = centered * (inv_std * scale_ref[...]) + shift_ref[...]
    o_ref[...] = y.astype(o_ref.dtype)


def _round_up(n, m):
    return ((n + m - 1) // m) * m


def _vmem_limit_bytes():
    """Generation-aware scoped-VMEM request with headroom."""
    try:
        physical = int(pltpu.get_tpu_info().vmem_capacity_bytes)
    except Exception:
        physical = 64 * 1024 * 1024  # conservative: assume v7x-sized VMEM
    # 25% headroom for compiler scratch; never request more than 96 MiB.
    return int(min(96 * 1024 * 1024, (physical * 3) // 4))


def _pick_tile_rows(rows, hidden_p, itemsize, vmem_limit, *, min_grid=4):
    """Row-tile sized from the VMEM byte budget (no exact-divisor requirement)."""
    # Sublane packing: 8 rows/vreg for 4-byte dtypes, 16 for bf16, 32 for int8/fp8.
    granule = max(8, 32 // itemsize)
    # Per-row VMEM cost: double-buffered input + output blocks + ~3 full f32 temps.
    per_row = hidden_p * (4 * itemsize + 3 * 4)
    budget = (vmem_limit * 3) // 4
    bw_cap = max(granule, (budget // per_row) // granule * granule)
    # Keep at least `min_grid` grid steps when rows allow (2 TCs on v7x + pipelining).
    par_cap = max(granule, _round_up(pl.cdiv(rows, min_grid), granule))
    tile = min(bw_cap, par_cap)
    if tile >= rows:
        return rows  # single full-extent block (always a legal block shape)
    return max(granule, tile)


def layer_norm(x, scale, shift, eps=1e-5):
    """Pallas TPU LayerNorm forward (matches the PyTorch module exactly)."""
    orig_shape = x.shape
    hidden = orig_shape[-1]
    rows = math.prod(orig_shape[:-1]) if len(orig_shape) > 1 else 1

    x2 = x.reshape(rows, hidden)
    # Affine params stay in f32 end-to-end (applied in f32 inside the kernel).
    scale2 = jnp.asarray(scale, dtype=jnp.float32).reshape(1, hidden)
    shift2 = jnp.asarray(shift, dtype=jnp.float32).reshape(1, hidden)

    # Lane-dense blocks: pad hidden to a multiple of 128 when needed.
    # TODO(synk): for tiny hidden, packing several rows per lane group would avoid
    # the wrapper-side pad traffic entirely (segmented reduction kernel).
    hidden_p = _round_up(hidden, _LANE)
    masked = hidden_p != hidden
    if masked:
        pad = hidden_p - hidden
        x2 = jnp.pad(x2, ((0, 0), (0, pad)))
        scale2 = jnp.pad(scale2, ((0, 0), (0, pad)))
        shift2 = jnp.pad(shift2, ((0, 0), (0, pad)))

    itemsize = jnp.dtype(x.dtype).itemsize
    vmem_limit = _vmem_limit_bytes()
    tile_rows = _pick_tile_rows(rows, hidden_p, itemsize, vmem_limit)
    grid = (pl.cdiv(rows, tile_rows),)

    kernel = functools.partial(
        _layer_norm_kernel, eps=eps, hidden=hidden, masked=masked)

    out2 = pl.pallas_call(
        kernel,
        out_shape=jax.ShapeDtypeStruct((rows, hidden_p), x.dtype),
        grid_spec=pltpu.PrefetchScalarGridSpec(
            num_scalar_prefetch=0,
            grid=grid,
            in_specs=[
                pl.BlockSpec((tile_rows, hidden_p), lambda i: (i, 0)),
                pl.BlockSpec((1, hidden_p), lambda i: (0, 0)),
                pl.BlockSpec((1, hidden_p), lambda i: (0, 0)),
            ],
            out_specs=pl.BlockSpec((tile_rows, hidden_p), lambda i: (i, 0)),
        ),
        compiler_params=pltpu.CompilerParams(
            dimension_semantics=("parallel",),
            vmem_limit_bytes=vmem_limit,
        ),
    )(x2, scale2, shift2)

    if masked:
        out2 = out2[:, :hidden]
    return out2.reshape(orig_shape)


def _layer_norm_ref(x, scale, shift, eps=1e-5):
    x32 = x.astype(jnp.float32)
    mean = jnp.mean(x32, axis=-1, keepdims=True)
    var = jnp.mean((x32 - mean) ** 2, axis=-1, keepdims=True)
    y = scale.astype(jnp.float32) * (x32 - mean) / jnp.sqrt(var + eps) \
        + shift.astype(jnp.float32)
    return y.astype(x.dtype)


if __name__ == "__main__":
    key = jax.random.PRNGKey(0)
    kx, ks, kb = jax.random.split(key, 3)

    # Small shapes consistent with an LN input: (batch, seq, hidden)
    batch, seq, hidden = 2, 8, 32
    x = jax.random.normal(kx, (batch, seq, hidden), dtype=jnp.float32)
    # Non-trivial affine params to exercise scale/shift (module inits to 1/0).
    scale = 1.0 + 0.1 * jax.random.normal(ks, (hidden,), dtype=jnp.float32)
    shift = 0.1 * jax.random.normal(kb, (hidden,), dtype=jnp.float32)

    y = layer_norm(x, scale, shift)
    y = jax.block_until_ready(y)

    y_ref = _layer_norm_ref(x, scale, shift)

    assert y.shape == x.shape and y.dtype == x.dtype
    assert bool(jnp.allclose(y, y_ref, atol=1e-5, rtol=1e-5)), "mismatch vs reference"

    # Sanity: normalized (pre-affine) rows have ~0 mean, ~1 var.
    y_plain = layer_norm(x, jnp.ones((hidden,)), jnp.zeros((hidden,)))
    assert bool(jnp.allclose(jnp.mean(y_plain, axis=-1), 0.0, atol=1e-5))
    assert bool(jnp.allclose(jnp.var(y_plain, axis=-1), 1.0, atol=1e-3))

    print("KERNEL_OK")
</pallas_src>

<mosaic_0001>
module attributes {stable_mosaic.version = 11 : i64} {
  func.func @_layer_norm_kernel(%arg0: i32, %arg1: memref<8x128xf32, #tpu.memory_space<vmem>>, %arg2: memref<1x128xf32, #tpu.memory_space<vmem>>, %arg3: memref<1x128xf32, #tpu.memory_space<vmem>>, %arg4: memref<8x128xf32, #tpu.memory_space<vmem>>) attributes {dimension_semantics = [#tpu.dimension_semantics<parallel>], iteration_bounds = array<i64: 2>, scalar_prefetch = 0 : i64, scratch_operands = 0 : i64, tpu.core_type = #tpu.core_type<tc>, window_params = [{transform_indices = @transform_0, window_bounds = array<i64: 8, 128>}, {pipeline_mode = #tpu.pipeline_mode<synchronous>, transform_indices = @transform_1, window_bounds = array<i64: 1, 128>}, {pipeline_mode = #tpu.pipeline_mode<synchronous>, transform_indices = @transform_2, window_bounds = array<i64: 1, 128>}, {transform_indices = @transform_3, window_bounds = array<i64: 8, 128>}]} {
    %c0 = arith.constant 0 : index
    %c0_0 = arith.constant 0 : index
    %0 = vector.load %arg1[%c0, %c0_0] : memref<8x128xf32, #tpu.memory_space<vmem>>, vector<8x128xf32>
    %cst = arith.constant dense<0.000000e+00> : vector<8xf32>
    %1 = vector.multi_reduction <add>, %0, %cst [1] : vector<8x128xf32> to vector<8xf32>
    %2 = vector.shape_cast %1 : vector<8xf32> to vector<8x1xf32>
    %cst_1 = arith.constant 3.125000e-02 : f32
    %3 = vector.broadcast %cst_1 : f32 to vector<8x1xf32>
    %4 = arith.mulf %2, %3 : vector<8x1xf32>
    %5 = vector.broadcast %4 : vector<8x1xf32> to vector<8x128xf32>
    %6 = arith.subf %0, %5 : vector<8x128xf32>
    %7 = tpu.iota {dimensions = array<i32: 1>} : vector<1x128xi32>
    %c32_i32 = arith.constant 32 : i32
    %8 = vector.broadcast %c32_i32 : i32 to vector<1x128xi32>
    %9 = arith.cmpi slt, %7, %8 : vector<1x128xi32>
    %cst_2 = arith.constant 0.000000e+00 : f32
    %10 = vector.shape_cast %9 : vector<1x128xi1> to vector<1x128xi1>
    %11 = vector.broadcast %10 : vector<1x128xi1> to vector<8x128xi1>
    %12 = vector.broadcast %cst_2 : f32 to vector<8x128xf32>
    %13 = arith.select %11, %6, %12 : vector<8x128xi1>, vector<8x128xf32>
    %14 = arith.mulf %13, %13 : vector<8x128xf32>
    %cst_3 = arith.constant dense<0.000000e+00> : vector<8xf32>
    %15 = vector.multi_reduction <add>, %14, %cst_3 [1] : vector<8x128xf32> to vector<8xf32>
    %16 = vector.shape_cast %15 : vector<8xf32> to vector<8x1xf32>
    %cst_4 = arith.constant 3.125000e-02 : f32
    %17 = vector.broadcast %cst_4 : f32 to vector<8x1xf32>
    %18 = arith.mulf %16, %17 : vector<8x1xf32>
    %cst_5 = arith.constant 9.99999974E-6 : f32
    %19 = vector.broadcast %cst_5 : f32 to vector<8x1xf32>
    %20 = arith.addf %18, %19 : vector<8x1xf32>
    %21 = math.rsqrt %20 : vector<8x1xf32>
    %c0_6 = arith.constant 0 : index
    %c0_7 = arith.constant 0 : index
    %22 = vector.load %arg2[%c0_6, %c0_7] : memref<1x128xf32, #tpu.memory_space<vmem>>, vector<1x128xf32>
    %23 = vector.broadcast %21 : vector<8x1xf32> to vector<8x128xf32>
    %24 = vector.broadcast %22 : vector<1x128xf32> to vector<8x128xf32>
    %25 = arith.mulf %23, %24 : vector<8x128xf32>
    %26 = arith.mulf %6, %25 : vector<8x128xf32>
    %c0_8 = arith.constant 0 : index
    %c0_9 = arith.constant 0 : index
    %27 = vector.load %arg3[%c0_8, %c0_9] : memref<1x128xf32, #tpu.memory_space<vmem>>, vector<1x128xf32>
    %28 = vector.broadcast %27 : vector<1x128xf32> to vector<8x128xf32>
    %29 = arith.addf %26, %28 : vector<8x128xf32>
    %c0_10 = arith.constant 0 : index
    %c0_11 = arith.constant 0 : index
    %30 = vector.load %arg4[%c0_10, %c0_11] : memref<8x128xf32, #tpu.memory_space<vmem>>, vector<8x128xf32>
    tpu.vector_store %arg4[%c0_10, %c0_11], %29 {strides = array<i32>} : memref<8x128xf32, #tpu.memory_space<vmem>>, vector<8x128xf32>,
    return
  }
  func.func @transform_0(%arg0: i32) -> (i32, i32) {
    %c0_i32 = arith.constant 0 : i32
    %c0_i32_0 = arith.constant 0 : i32
    return %arg0, %c0_i32 : i32, i32
  }
  func.func @transform_1(%arg0: i32) -> (i32, i32) {
    %c0_i32 = arith.constant 0 : i32
    %c0_i32_0 = arith.constant 0 : i32
    %c0_i32_1 = arith.constant 0 : i32
    return %c0_i32, %c0_i32_0 : i32, i32
  }
  func.func @transform_2(%arg0: i32) -> (i32, i32) {
    %c0_i32 = arith.constant 0 : i32
    %c0_i32_0 = arith.constant 0 : i32
    %c0_i32_1 = arith.constant 0 : i32
    return %c0_i32, %c0_i32_0 : i32, i32
  }
  func.func @transform_3(%arg0: i32) -> (i32, i32) {
    %c0_i32 = arith.constant 0 : i32
    %c0_i32_0 = arith.constant 0 : i32
    return %arg0, %c0_i32 : i32, i32
  }
}

</mosaic_0001>

<llo_original>
// kernel: tpu_custom_call.1
$region0: #{tpu_custom_call.1}
  #allocation0 [shape = 'u32[]', space=smem, size = 0x4, offset = 0x4, fixed_abs, tag = 'smem constant byte address 0x4 - core index']
  #allocation1 [shape = 'u32[72,128]{1,0:T(1,128)}', space=vmem, size = 0x9000, scoped, tag = 'internal scratch']
  %s0 = inlined_call_operand.hbm [shape: f32[16,128], index: 0, kind: input, shape index: {}]
  %s1 = inlined_call_operand.hbm [shape: f32[1,128], index: 1, kind: input, shape index: {}]
  %s2 = inlined_call_operand.vmem [shape: f32[1,128], index: 2, kind: input, shape index: {}]
  %s3 = inlined_call_operand.hbm [shape: f32[16,128], index: 3, kind: output, shape index: {}]
  %s4 = sld [smem:[#allocation0]]
  $region53: #{tpu_custom_call.1} parent=0
    _
  %s6 = ssub.s32 1, %s4
  %s7 = scalar_select 0, %s6, %s4
  $region1: #{tpu_custom_call.1} parent=0
    #allocation2 [shape = 'u8[8192]{0}', space=vmem, size = 0x2000, scoped, tag = 'input window, operand 0']
    #allocation3 [shape = 's32[2]{0}', space=sflag, size = 0x8, scoped, tag = 'scoped memory for tpu_custom_call.1']
    #allocation4 [shape = 's32[2]{0}', space=sflag, size = 0x8, scoped, tag = 'scoped memory for tpu_custom_call.1']
    #allocation5 [shape = 'u8[512]{0}', space=vmem, size = 0x400, scoped, tag = 'input window, operand 1, single buffered']
    #allocation6 [shape = 's32[1]{0}', space=sflag, size = 0x4, scoped, tag = 'scoped memory for tpu_custom_call.1']
    #allocation7 [shape = 'u8[8192]{0}', space=vmem, size = 0x2000, scoped, tag = 'output window, operand 0']
    %8 = vsyncpa [#allocation3], 0
    %s9 = scalar_lea.sflag [#allocation3], 1
    %10 = vsyncpa %s9, 0
    %11 = vsyncpa [#allocation6], 0
    %12 = vsyncpa [#allocation4], 0
    %s13 = scalar_lea.sflag [#allocation4], 1
    %14 = vsyncpa %s13, 0
    loop: start=0, step=1, limit=4
    $region2: #{tpu_custom_call.1} parent=1 // loop_pre_header
      _
    $region3: #{tpu_custom_call.1} parent=1 // loop_header
      %s16 = sphi 0, %s20
      %p17 = scmp.ge.s32.totalorder %s16, 4
      %s26 = sphi 0, %s28
      %s29 = sphi 0, %s26
      %s30 = sphi 0, %s29
      %s46 = sphi 0, %s30
      %s50 = sphi 0, %s50
      %s52 = sphi 0, %s50
      %s53 = sphi 0, %s52
      %s67 = sphi 0, %s53
      %s71 = sphi 0, %s71
      %s73 = sphi 0, %s71
      %s74 = sphi 0, %s73
      %s88 = sphi 0, %s74
      %s94 = sphi 0, %s96
      %s97 = sphi 0, %s94
      %s98 = sphi 0, %s97
      %s114 = sphi 0, %s98
    $region4: #{tpu_custom_call.1} parent=1 // loop_header_branch
      %19 = sbr.rel (%p17) target = $region8
    $region5: #{tpu_custom_call.1} parent=1 // loop_body
      %s21 = ssub.s32 %s16, 1
      %s22 = ssub.s32 %s16, 2
      %s23 = sadd.s32 %s16, 1
      %s24 = ssub.s32 %s16, %s23
      %p25 = scmp.eq.s32.totalorder %s24, 0
      %s27 = sadd.s32 %s26, 1
      %s28 = scalar_select %p25, %s26, %s27
      %p31 = pneg %p25
      %p32 = scmp.eq.s32.totalorder %s16, 1
      %p33 = por %p31, %p32
      %p34 = scmp.ne.s32.totalorder %s26, %s29
      %p35 = scmp.eq.s32.totalorder %s16, 0
      %p36 = por %p34, %p35
      %p37 = scmp.ne.s32.totalorder %s26, %s29
      %p38 = scmp.eq.s32.totalorder %s21, 1
      %p39 = por %p37, %p38
      %p40 = scmp.ne.s32.totalorder %s29, %s30
      %p41 = scmp.eq.s32.totalorder %s21, 0
      %p42 = por %p40, %p41
      %p43 = scmp.ne.s32.totalorder %s29, %s30
      %p44 = scmp.eq.s32.totalorder %s22, 1
      %p45 = por %p43, %p44
      %p47 = scmp.ne.s32.totalorder %s30, %s46
      %p48 = scmp.eq.s32.totalorder %s22, 0
      %p49 = por %p47, %p48
      %s51 = sadd.s32 %s50, 1
      %p54 = scmp.eq.s32.totalorder %s16, 1
      %p55 = scmp.ne.s32.totalorder %s50, %s52
      %p56 = scmp.eq.s32.totalorder %s16, 0
      %p57 = por %p55, %p56
      %p58 = scmp.ne.s32.totalorder %s50, %s52
      %p59 = scmp.eq.s32.totalorder %s21, 1
      %p60 = por %p58, %p59
      %p61 = scmp.ne.s32.totalorder %s52, %s53
      %p62 = scmp.eq.s32.totalorder %s21, 0
      %p63 = por %p61, %p62
      %p64 = scmp.ne.s32.totalorder %s52, %s53
      %p65 = scmp.eq.s32.totalorder %s22, 1
      %p66 = por %p64, %p65
      %p68 = scmp.ne.s32.totalorder %s53, %s67
      %p69 = scmp.eq.s32.totalorder %s22, 0
      %p70 = por %p68, %p69
      %s72 = sadd.s32 %s71, 1
      %p75 = scmp.eq.s32.totalorder %s16, 1
      %p76 = scmp.ne.s32.totalorder %s71, %s73
      %p77 = scmp.eq.s32.totalorder %s16, 0
      %p78 = por %p76, %p77
      %p79 = scmp.ne.s32.totalorder %s71, %s73
      %p80 = scmp.eq.s32.totalorder %s21, 1
      %p81 = por %p79, %p80
      %p82 = scmp.ne.s32.totalorder %s73, %s74
      %p83 = scmp.eq.s32.totalorder %s21, 0
      %p84 = por %p82, %p83
      %p85 = scmp.ne.s32.totalorder %s73, %s74
      %p86 = scmp.eq.s32.totalorder %s22, 1
      %p87 = por %p85, %p86
      %p89 = scmp.ne.s32.totalorder %s74, %s88
      %p90 = scmp.eq.s32.totalorder %s22, 0
      %p91 = por %p89, %p90
      %s92 = ssub.s32 %s16, %s23
      %p93 = scmp.eq.s32.totalorder %s92, 0
      %s95 = sadd.s32 %s94, 1
      %s96 = scalar_select %p93, %s94, %s95
      %p99 = pneg %p93
      %p100 = scmp.eq.s32.totalorder %s16, 1
      %p101 = por %p99, %p100
      %p102 = scmp.ne.s32.totalorder %s94, %s97
      %p103 = scmp.eq.s32.totalorder %s16, 0
      %p104 = por %p102, %p103
      %p105 = scmp.ne.s32.totalorder %s94, %s97
      %p106 = scmp.eq.s32.totalorder %s21, 1
      %p107 = por %p105, %p106
      %p108 = scmp.ne.s32.totalorder %s97, %s98
      %p109 = scmp.eq.s32.totalorder %s21, 0
      %p110 = por %p108, %p109
      %p111 = scmp.ne.s32.totalorder %s97, %s98
      %p112 = scmp.eq.s32.totalorder %s22, 1
      %p113 = por %p111, %p112
      %p115 = scmp.ne.s32.totalorder %s98, %s114
      %p116 = scmp.eq.s32.totalorder %s22, 0
      %p117 = por %p115, %p116
      %p118 = scmp.le.s32.totalorder 1, %s16
      %p119 = scmp.lt.s32.totalorder %s16, 3
      %p120 = pnand %p118, %p119
      %p121 = pneg %p120
      // Predicated region
      $region9: #{tpu_custom_call.1} parent=5 // pred_check
        _
      $region10: #{tpu_custom_call.1} parent=5 // pred_check_branch
        %123 = sbr.rel (%p120) target = $region12
      $region11: #{tpu_custom_call.1} parent=5 // pred_region
        %s124 = ssub.s32 %s16, 1
        // Predicated region
        $region13: #{tpu_custom_call.1} parent=11 // pred_check
          %p125 = pneg %p63
        $region14: #{tpu_custom_call.1} parent=11 // pred_check_branch
          %127 = sbr.rel (%p125) target = $region16
        $region15: #{tpu_custom_call.1} parent=11 // pred_region
          %129 = vsyncadd [#allocation6], 0
          %s131 = sshll.u32 %s1, 4
          %s132 = int_to_ptr.hbm [resolvable:$true] %s131
          %s133 = sshll.u32 [#allocation5], 4
          %s134 = int_to_ptr.vmem [resolvable:$true] %s133
          %136 = dma.hbm_to_vmem [thread:$0]  %s132, 16, %s134, [#allocation6]
        $region16: #{tpu_custom_call.1} parent=11 // pred_fallthru
          _
        // Predicated region
        $region17: #{tpu_custom_call.1} parent=11 // pred_check
          %p137 = pneg %p84
        $region18: #{tpu_custom_call.1} parent=11 // pred_check_branch
          %139 = sbr.rel (%p137) target = $region20
        $region19: #{tpu_custom_call.1} parent=11 // pred_region
          _
        $region20: #{tpu_custom_call.1} parent=11 // pred_fallthru
          _
      $region12: #{tpu_custom_call.1} parent=5 // pred_fallthru
        _
      %p140 = scmp.lt.s32.totalorder %s16, 2
      // Predicated region
      $region21: #{tpu_custom_call.1} parent=5 // pred_check
        %p141 = pneg %p140
      $region22: #{tpu_custom_call.1} parent=5 // pred_check_branch
        %143 = sbr.rel (%p141) target = $region24
      $region23: #{tpu_custom_call.1} parent=5 // pred_region
        // Predicated region
        $region25: #{tpu_custom_call.1} parent=23 // pred_check
          %p144 = pneg %p36
        $region26: #{tpu_custom_call.1} parent=23 // pred_check_branch
          %146 = sbr.rel (%p144) target = $region28
        $region27: #{tpu_custom_call.1} parent=23 // pred_region
          %s147 = sand.u32 %s26, 1
          %s148 = scalar_lea.sflag [#allocation3], %s147
          %s149 = sand.u32 %s26, 1
          %s150 = smul.addr %s149, 8
          %s151 = scalar_lea.vmem [#allocation2], %s150
          %153 = vsyncadd %s148, 0
          %s154 = smul.addr %s16, 8
          %s155 = scalar_lea.hbm %s0, %s154
          %s157 = sshll.u32 %s155, 4
          %s158 = int_to_ptr.hbm [resolvable:$true] %s157
          %s159 = sshll.u32 %s151, 4
          %s160 = int_to_ptr.vmem [resolvable:$true] %s159
          %162 = dma.hbm_to_vmem [thread:$0]  %s158, 128, %s160, %s148
        $region28: #{tpu_custom_call.1} parent=23 // pred_fallthru
          _
      $region24: #{tpu_custom_call.1} parent=5 // pred_fallthru
        _
      %p163 = scmp.le.s32.totalorder 1, %s16
      %p164 = scmp.lt.s32.totalorder %s16, 3
      %p165 = pnand %p163, %p164
      %p166 = pneg %p165
      // Predicated region
      $region29: #{tpu_custom_call.1} parent=5 // pred_check
        _
      $region30: #{tpu_custom_call.1} parent=5 // pred_check_branch
        %168 = sbr.rel (%p165) target = $region32
      $region31: #{tpu_custom_call.1} parent=5 // pred_region
        %s169 = ssub.s32 %s16, 1
        %s170 = sand.u32 %s29, 1
        %s171 = scalar_lea.sflag [#allocation3], %s170
        %s172 = sand.u32 %s29, 1
        %s173 = smul.addr %s172, 8
        %s174 = scalar_lea.vmem [#allocation2], %s173
        // Predicated region
        $region33: #{tpu_custom_call.1} parent=31 // pred_check
          %p175 = pneg %p42
        $region34: #{tpu_custom_call.1} parent=31 // pred_check_branch
          %177 = sbr.rel (%p175) target = $region36
        $region35: #{tpu_custom_call.1} parent=31 // pred_region
          %179 = dma.done %s171, 128
        $region36: #{tpu_custom_call.1} parent=31 // pred_fallthru
          _
        // Predicated region
        $region37: #{tpu_custom_call.1} parent=31 // pred_check
          %p180 = pneg %p63
        $region38: #{tpu_custom_call.1} parent=31 // pred_check_branch
          %182 = sbr.rel (%p180) target = $region40
        $region39: #{tpu_custom_call.1} parent=31 // pred_region
          %184 = dma.done [#allocation6], 16
        $region40: #{tpu_custom_call.1} parent=31 // pred_fallthru
          _
        %s185 = sand.u32 %s29, 1
        %s186 = scalar_lea.sflag [#allocation3], %s185
        %s187 = sand.u32 %s29, 1
        %s188 = smul.addr %s187, 8
        %s189 = scalar_lea.vmem [#allocation2], %s188
        %p190 = pneg %p42
        %p191 = pneg %p39
        %p192 = pneg %p63
        %p193 = pneg %p60
        %p194 = pneg %p84
        %p195 = pneg %p81
        %p196 = pneg %p110
        %p197 = pneg %p107
        %s198 = sand.u32 %s97, 1
        %s199 = scalar_lea.sflag [#allocation4], %s198
        %s200 = sand.u32 %s97, 1
        %s201 = smul.addr %s200, 8
        %s202 = scalar_lea.vmem [#allocation7], %s201
        %v203 = vld [vmem:[%s174] sm:$0xff]
        %204 = vadd.xlane.f32.xlu0 %v203
        %v205 = vpop.xlane.xlu0 %204
        %v206 = vmul.f32 %v205, 0.03125
        %v207 = vsub.f32 %v203, %v206
        %v208 = vlaneseq
        %v209 = vand.u32 %v208, 127
        %vm210 = vcmp.lt.s32.totalorder %v209, 32
        %v211 = vsel %vm210, 1, 0
        %vm212 = vcmp.eq.s32.totalorder %v211, 1
        %v213 = vsel %vm212, %v207, 0.0
        %v214 = vmul.f32 %v213, %v213
        %215 = vadd.xlane.f32.xlu0 %v214
        %v216 = vpop.xlane.xlu0 %215
        %v217 = vmul.f32 %v216, 0.03125
        %v218 = vadd.f32 %v217, 1e-05
        %v219 = vrsqrt.pop %v218
        %v220 = vmul.f32 %v219, %v218
        %v221 = vmul.f32 %v220, %v219
        %v222 = vmul.f32 0.5, %v221
        %v223 = vsub.f32 1.5, %v222
        %v224 = vmul.f32 %v219, %v223
        %vm225 = vweird.f32 %v218
        %vm226 = vweird.f32 %v219
        %vm227 = vmor %vm225, %vm226
        %v228 = vsel %vm227, %v219, %v224
        %v229 = vld [vmem:[#allocation5] sm:$0x1]
        %v231 = vperm.slane %v229, 0
        %v233 = vmul.f32 %v228, %v231
        %v234 = vmul.f32 %v207, %v233
        %v235 = vld [vmem:[%s2] sm:$0x1]
        %v237 = vperm.slane %v235, 0
        %v239 = vadd.f32 %v234, %v237
        %240 = vst [vmem:[%s202] sm:$0xff] %v239
        %s241 = sand.u32 %s97, 1
        %s242 = scalar_lea.sflag [#allocation4], %s241
        %s243 = sand.u32 %s97, 1
        %s244 = smul.addr %s243, 8
        %s245 = scalar_lea.vmem [#allocation7], %s244
        // Predicated region
        $region41: #{tpu_custom_call.1} parent=31 // pred_check
          %p246 = pneg %p107
        $region42: #{tpu_custom_call.1} parent=31 // pred_check_branch
          %248 = sbr.rel (%p246) target = $region44
        $region43: #{tpu_custom_call.1} parent=31 // pred_region
          %250 = vsyncadd %s242, 0
          %s251 = smul.addr %s21, 8
          %s252 = scalar_lea.hbm %s3, %s251
          %s254 = sshll.u32 %s245, 4
          %s255 = int_to_ptr.vmem [resolvable:$true] %s254
          %s256 = sshll.u32 %s252, 4
          %s257 = int_to_ptr.hbm [resolvable:$true] %s256
          %259 = dma.vmem_to_hbm [thread:$0]  %s255, 128, %s257, %s242
        $region44: #{tpu_custom_call.1} parent=31 // pred_fallthru
          _
      $region32: #{tpu_custom_call.1} parent=5 // pred_fallthru
        _
      %p260 = scmp.le.s32.totalorder 2, %s16
      // Predicated region
      $region45: #{tpu_custom_call.1} parent=5 // pred_check
        %p261 = pneg %p260
      $region46: #{tpu_custom_call.1} parent=5 // pred_check_branch
        %263 = sbr.rel (%p261) target = $region48
      $region47: #{tpu_custom_call.1} parent=5 // pred_region
        %s264 = ssub.s32 %s16, 2
        // Predicated region
        $region49: #{tpu_custom_call.1} parent=47 // pred_check
          %p265 = pneg %p113
        $region50: #{tpu_custom_call.1} parent=47 // pred_check_branch
          %267 = sbr.rel (%p265) target = $region52
        $region51: #{tpu_custom_call.1} parent=47 // pred_region
          %s268 = sand.u32 %s98, 1
          %s269 = scalar_lea.sflag [#allocation4], %s268
          %s270 = sand.u32 %s98, 1
          %s271 = smul.addr %s270, 8
          %s272 = scalar_lea.vmem [#allocation7], %s271
          %274 = dma.done %s269, 128
        $region52: #{tpu_custom_call.1} parent=47 // pred_fallthru
          _
      $region48: #{tpu_custom_call.1} parent=5 // pred_fallthru
        _
    $region6: #{tpu_custom_call.1} parent=1 // loop_footer
      %s20 = sadd.s32 1, %s16
    $region7: #{tpu_custom_call.1} parent=1 // loop_footer_branch
      %15 = sbr.rel target = $region3
    $region8: #{tpu_custom_call.1} parent=1 // loop_exit
      _
    %275 = vsyncpa [#allocation3], 1
    %s276 = scalar_lea.sflag [#allocation3], 1
    %277 = vsyncpa %s276, 1
    %278 = vsyncpa [#allocation6], 1
    %279 = vsyncpa [#allocation4], 1
    %s280 = scalar_lea.sflag [#allocation4], 1
    %281 = vsyncpa %s280, 1

</llo_original>
